<compile_context>
chip_gen: v6e
topology: v6e:2x2x1
jax: 0.10.0
libtpu: 0.0.40
codegen_flags: <defaults>
</compile_context>

<pallas_src>
import functools

import jax
import jax.numpy as jnp
from jax import lax
from jax.experimental import pallas as pl
from jax.experimental.pallas import tpu as pltpu


def _riffle(a, b, axis):
    """Perfect interleave of `a` and `b` along `axis` (size n, power of two).

    out[..., 2k, ...]   = a[..., k, ...]
    out[..., 2k+1, ...] = b[..., k, ...]

    Implemented as a log2(n)-level roll+select butterfly on the concatenation
    [A | B]: at level q every 4q-sized block swaps its 2nd and 3rd quarters.
    Only rotations and compares/selects — no gathers, no strided accesses.
    """
    axis = axis % a.ndim
    n = a.shape[axis]
    c = jnp.concatenate([a, b], axis=axis)          # [A | B], size 2n along `axis`
    q = n // 2
    if q < 1:
        return c                                     # n == 1: [a, b] already interleaved
    idx = lax.broadcasted_iota(jnp.int32, c.shape, axis)
    while q >= 1:
        pos = idx & (4 * q - 1)                      # position inside each 4q block (4q is pow2)
        in_q2 = (pos >= q) & (pos < 2 * q)
        in_q3 = (pos >= 2 * q) & (pos < 3 * q)
        fwd = jnp.roll(c, q, axis=axis)              # fwd[k] = c[k - q]
        bwd = jnp.roll(c, -q, axis=axis)             # bwd[k] = c[k + q]
        c = jnp.where(in_q3, fwd, jnp.where(in_q2, bwd, c))
        q //= 2
    return c


def _pixel_shuffle2_kernel(x_ref, o_ref, *, rc):
    # x_ref : (1, 4*cb, ht, W)   sub-pixel planes for cb output channels
    # o_ref : (1,   cb, 2*ht, 2*W)
    cb = o_ref.shape[1]
    ht = x_ref.shape[2]
    n_chunks = ht // rc

    def channel_body(g, carry):
        base = 4 * g

        def chunk_body(t, inner_carry):
            r0 = t * rc
            a = x_ref[0, base + 0, pl.ds(r0, rc), :]    # even rows, even cols
            b = x_ref[0, base + 1, pl.ds(r0, rc), :]    # even rows, odd  cols
            c = x_ref[0, base + 2, pl.ds(r0, rc), :]    # odd  rows, even cols
            d = x_ref[0, base + 3, pl.ds(r0, rc), :]    # odd  rows, odd  cols
            top = _riffle(a, b, axis=-1)                # (rc, 2W)   even output rows
            bot = _riffle(c, d, axis=-1)                # (rc, 2W)   odd  output rows
            out = _riffle(top, bot, axis=-2)            # (2rc, 2W)  rows interleaved
            o_ref[0, g, pl.ds(2 * r0, 2 * rc), :] = out  # dense contiguous store (no stride)
            return inner_carry

        return lax.fori_loop(0, n_chunks, chunk_body, carry)

    lax.fori_loop(0, cb, channel_body, 0)


def _pick_tiles(C, H, W, itemsize, target_block_bytes=6 * 1024 * 1024):
    """Pick (channels per block, H rows per block, in-kernel row chunk).

    Blocks are grown along H first, then channels, targeting ~6 MiB per direction
    per grid step (double-buffered footprint ~24 MiB -> fits every TPU generation,
    including v7x's 64 MiB VMEM).
    """
    bytes_per_row = 4 * W * itemsize     # one output channel's input (== output) bytes per H row

    # H tile: full H if it fits, else the largest multiple-of-8 divisor under the cap
    # (tiled last-two block dims must be multiples of (8, 128) unless they equal the
    #  full array dims; W is always kept full so only the H tile needs the x8 rule).
    if H * bytes_per_row <= target_block_bytes:
        ht = H
    else:
        ht = None
        d = H - (H % 8)
        while d >= 8:
            if H % d == 0 and d * bytes_per_row <= target_block_bytes:
                ht = d
                break
            d -= 8
        if ht is None:
            ht = H  # TODO(synk): H with no multiple-of-8 divisor under the cap falls back to full H

    # Channel block: grow while the block stays under the target.
    cb = 1
    for d in range(1, C + 1):
        if C % d == 0 and d * ht * bytes_per_row <= target_block_bytes:
            cb = d

    # In-kernel row chunk: largest power of two (<= 8) dividing ht keeps the riffle
    # working set register-resident while the DMA block stays large.
    rc = 1
    while rc * 2 <= 8 and ht % (rc * 2) == 0:
        rc *= 2
    return cb, ht, rc


def pixel_shuffle2(x):
    """PixelShuffle with upscale factor 2.  x: (B, 4*C, H, W) -> (B, C, 2H, 2W)."""
    B, C4, H, W = x.shape
    assert C4 % 4 == 0, "channel dim must be divisible by upscale_factor**2 = 4"
    assert W >= 1 and (W & (W - 1)) == 0, "lane riffle requires power-of-two W"
    C = C4 // 4

    cb, ht, rc = _pick_tiles(C, H, W, x.dtype.itemsize)
    grid = (B, C // cb, H // ht)

    kernel = functools.partial(_pixel_shuffle2_kernel, rc=rc)
    return pl.pallas_call(
        kernel,
        out_shape=jax.ShapeDtypeStruct((B, C, 2 * H, 2 * W), x.dtype),
        grid=grid,
        in_specs=[pl.BlockSpec((1, 4 * cb, ht, W), lambda b, c, h: (b, c, h, 0))],
        out_specs=pl.BlockSpec((1, cb, 2 * ht, 2 * W), lambda b, c, h: (b, c, h, 0)),
        compiler_params=pltpu.CompilerParams(
            dimension_semantics=("parallel", "parallel", "parallel"),
            vmem_limit_bytes=48 * 1024 * 1024),
        cost_estimate=pl.CostEstimate(
            flops=0, transcendentals=0,
            bytes_accessed=2 * x.size * x.dtype.itemsize),
    )(x)


def pixel_shuffle2_ref(x):
    """Pure-JAX reference (mirrors torch.nn.PixelShuffle(2))."""
    B, C4, H, W = x.shape
    C = C4 // 4
    y = x.reshape(B, C, 2, 2, H, W)
    y = jnp.transpose(y, (0, 1, 4, 2, 5, 3))  # (B, C, H, 2, W, 2)
    return y.reshape(B, C, 2 * H, 2 * W)


if __name__ == "__main__":
    key = jax.random.PRNGKey(0)
    # B=2, in_channels=8 (=> 2 output channels), spatial 16x16
    x = jax.random.normal(key, (2, 8, 16, 16), dtype=jnp.float32)

    y = jax.block_until_ready(pixel_shuffle2(x))
    y_ref = pixel_shuffle2_ref(x)

    assert y.shape == (2, 2, 32, 32), y.shape
    assert jnp.array_equal(y, y_ref), "mismatch vs reference"

    print("KERNEL_OK")
</pallas_src>

<mosaic_0001>
module attributes {stable_mosaic.version = 11 : i64} {
  func.func @_pixel_shuffle2_kernel(%arg0: i32, %arg1: i32, %arg2: i32, %arg3: memref<1x8x16x16xf32, #tpu.memory_space<vmem>>, %arg4: memref<1x2x32x32xf32, #tpu.memory_space<vmem>>) attributes {dimension_semantics = [#tpu.dimension_semantics<parallel>, #tpu.dimension_semantics<parallel>, #tpu.dimension_semantics<parallel>], iteration_bounds = array<i64: 2, 1, 1>, scalar_prefetch = 0 : i64, scratch_operands = 0 : i64, tpu.core_type = #tpu.core_type<tc>, window_params = [{transform_indices = @transform_0, window_bounds = array<i64: 1, 8, 16, 16>}, {transform_indices = @transform_1, window_bounds = array<i64: 1, 2, 32, 32>}]} {
    %c0_i32 = arith.constant 0 : i32
    %c2_i32 = arith.constant 2 : i32
    %0 = arith.addi %c0_i32, %c2_i32 : i32
    %c1_i32 = arith.constant 1 : i32
    scf.for %arg5 = %c0_i32 to %0 step %c1_i32  : i32 {
      %c4_i32 = arith.constant 4 : i32
      %1 = arith.muli %c4_i32, %arg5 : i32
      %c0_i32_1 = arith.constant 0 : i32
      %c2_i32_2 = arith.constant 2 : i32
      %2 = arith.addi %c0_i32_1, %c2_i32_2 : i32
      %c1_i32_3 = arith.constant 1 : i32
      scf.for %arg6 = %c0_i32_1 to %2 step %c1_i32_3  : i32 {
        %c8_i32 = arith.constant 8 : i32
        %3 = arith.muli %arg6, %c8_i32 : i32
        %c0_i32_5 = arith.constant 0 : i32
        %4 = arith.addi %1, %c0_i32_5 : i32
        %c0 = arith.constant 0 : index
        %5 = arith.index_cast %4 : i32 to index
        %6 = arith.index_cast %3 : i32 to index
        %c0_6 = arith.constant 0 : index
        %7 = vector.load %arg3[%c0, %5, %6, %c0_6] : memref<1x8x16x16xf32, #tpu.memory_space<vmem>>, vector<1x1x8x16xf32>
        %8 = vector.shape_cast %7 : vector<1x1x8x16xf32> to vector<8x16xf32>
        %c1_i32_7 = arith.constant 1 : i32
        %9 = arith.addi %1, %c1_i32_7 : i32
        %c0_8 = arith.constant 0 : index
        %10 = arith.index_cast %9 : i32 to index
        %11 = arith.index_cast %3 : i32 to index
        %c0_9 = arith.constant 0 : index
        %12 = vector.load %arg3[%c0_8, %10, %11, %c0_9] : memref<1x8x16x16xf32, #tpu.memory_space<vmem>>, vector<1x1x8x16xf32>
        %13 = vector.shape_cast %12 : vector<1x1x8x16xf32> to vector<8x16xf32>
        %c2_i32_10 = arith.constant 2 : i32
        %14 = arith.addi %1, %c2_i32_10 : i32
        %c0_11 = arith.constant 0 : index
        %15 = arith.index_cast %14 : i32 to index
        %16 = arith.index_cast %3 : i32 to index
        %c0_12 = arith.constant 0 : index
        %17 = vector.load %arg3[%c0_11, %15, %16, %c0_12] : memref<1x8x16x16xf32, #tpu.memory_space<vmem>>, vector<1x1x8x16xf32>
        %18 = vector.shape_cast %17 : vector<1x1x8x16xf32> to vector<8x16xf32>
        %c3_i32 = arith.constant 3 : i32
        %19 = arith.addi %1, %c3_i32 : i32
        %c0_13 = arith.constant 0 : index
        %20 = arith.index_cast %19 : i32 to index
        %21 = arith.index_cast %3 : i32 to index
        %c0_14 = arith.constant 0 : index
        %22 = vector.load %arg3[%c0_13, %20, %21, %c0_14] : memref<1x8x16x16xf32, #tpu.memory_space<vmem>>, vector<1x1x8x16xf32>
        %23 = vector.shape_cast %22 : vector<1x1x8x16xf32> to vector<8x16xf32>
        %24 = tpu.concatenate %8, %13 in 1 : vector<8x16xf32>, vector<8x16xf32> -> vector<8x32xf32>
        %25 = tpu.iota {dimensions = array<i32: 1>} : vector<8x32xi32>
        %c31_i32 = arith.constant 31 : i32
        %26 = vector.broadcast %c31_i32 : i32 to vector<8x32xi32>
        %27 = arith.andi %25, %26 : vector<8x32xi32>
        %c8_i32_15 = arith.constant 8 : i32
        %28 = vector.broadcast %c8_i32_15 : i32 to vector<8x32xi32>
        %29 = arith.cmpi sge, %27, %28 : vector<8x32xi32>
        %c16_i32 = arith.constant 16 : i32
        %30 = vector.broadcast %c16_i32 : i32 to vector<8x32xi32>
        %31 = arith.cmpi slt, %27, %30 : vector<8x32xi32>
        %32 = arith.andi %29, %31 : vector<8x32xi1>
        %c16_i32_16 = arith.constant 16 : i32
        %33 = vector.broadcast %c16_i32_16 : i32 to vector<8x32xi32>
        %34 = arith.cmpi sge, %27, %33 : vector<8x32xi32>
        %c24_i32 = arith.constant 24 : i32
        %35 = vector.broadcast %c24_i32 : i32 to vector<8x32xi32>
        %36 = arith.cmpi slt, %27, %35 : vector<8x32xi32>
        %37 = arith.andi %34, %36 : vector<8x32xi1>
        %38 = vector.extract_strided_slice %24 {offsets = [0, 24], sizes = [8, 8], strides = [1, 1]} : vector<8x32xf32> to vector<8x8xf32>
        %39 = vector.extract_strided_slice %24 {offsets = [0, 0], sizes = [8, 24], strides = [1, 1]} : vector<8x32xf32> to vector<8x24xf32>
        %40 = tpu.concatenate %38, %39 in 1 : vector<8x8xf32>, vector<8x24xf32> -> vector<8x32xf32>
        %41 = vector.extract_strided_slice %24 {offsets = [0, 8], sizes = [8, 24], strides = [1, 1]} : vector<8x32xf32> to vector<8x24xf32>
        %42 = vector.extract_strided_slice %24 {offsets = [0, 0], sizes = [8, 8], strides = [1, 1]} : vector<8x32xf32> to vector<8x8xf32>
        %43 = tpu.concatenate %41, %42 in 1 : vector<8x24xf32>, vector<8x8xf32> -> vector<8x32xf32>
        %44 = arith.select %32, %43, %24 : vector<8x32xi1>, vector<8x32xf32>
        %45 = arith.select %37, %40, %44 : vector<8x32xi1>, vector<8x32xf32>
        %c15_i32 = arith.constant 15 : i32
        %46 = vector.broadcast %c15_i32 : i32 to vector<8x32xi32>
        %47 = arith.andi %25, %46 : vector<8x32xi32>
        %c4_i32_17 = arith.constant 4 : i32
        %48 = vector.broadcast %c4_i32_17 : i32 to vector<8x32xi32>
        %49 = arith.cmpi sge, %47, %48 : vector<8x32xi32>
        %c8_i32_18 = arith.constant 8 : i32
        %50 = vector.broadcast %c8_i32_18 : i32 to vector<8x32xi32>
        %51 = arith.cmpi slt, %47, %50 : vector<8x32xi32>
        %52 = arith.andi %49, %51 : vector<8x32xi1>
        %c8_i32_19 = arith.constant 8 : i32
        %53 = vector.broadcast %c8_i32_19 : i32 to vector<8x32xi32>
        %54 = arith.cmpi sge, %47, %53 : vector<8x32xi32>
        %c12_i32 = arith.constant 12 : i32
        %55 = vector.broadcast %c12_i32 : i32 to vector<8x32xi32>
        %56 = arith.cmpi slt, %47, %55 : vector<8x32xi32>
        %57 = arith.andi %54, %56 : vector<8x32xi1>
        %58 = vector.extract_strided_slice %45 {offsets = [0, 28], sizes = [8, 4], strides = [1, 1]} : vector<8x32xf32> to vector<8x4xf32>
        %59 = vector.extract_strided_slice %45 {offsets = [0, 0], sizes = [8, 28], strides = [1, 1]} : vector<8x32xf32> to vector<8x28xf32>
        %60 = tpu.concatenate %58, %59 in 1 : vector<8x4xf32>, vector<8x28xf32> -> vector<8x32xf32>
        %61 = vector.extract_strided_slice %45 {offsets = [0, 4], sizes = [8, 28], strides = [1, 1]} : vector<8x32xf32> to vector<8x28xf32>
        %62 = vector.extract_strided_slice %45 {offsets = [0, 0], sizes = [8, 4], strides = [1, 1]} : vector<8x32xf32> to vector<8x4xf32>
        %63 = tpu.concatenate %61, %62 in 1 : vector<8x28xf32>, vector<8x4xf32> -> vector<8x32xf32>
        %64 = arith.select %52, %63, %45 : vector<8x32xi1>, vector<8x32xf32>
        %65 = arith.select %57, %60, %64 : vector<8x32xi1>, vector<8x32xf32>
        %c7_i32 = arith.constant 7 : i32
        %66 = vector.broadcast %c7_i32 : i32 to vector<8x32xi32>
        %67 = arith.andi %25, %66 : vector<8x32xi32>
        %c2_i32_20 = arith.constant 2 : i32
        %68 = vector.broadcast %c2_i32_20 : i32 to vector<8x32xi32>
        %69 = arith.cmpi sge, %67, %68 : vector<8x32xi32>
        %c4_i32_21 = arith.constant 4 : i32
        %70 = vector.broadcast %c4_i32_21 : i32 to vector<8x32xi32>
        %71 = arith.cmpi slt, %67, %70 : vector<8x32xi32>
        %72 = arith.andi %69, %71 : vector<8x32xi1>
        %c4_i32_22 = arith.constant 4 : i32
        %73 = vector.broadcast %c4_i32_22 : i32 to vector<8x32xi32>
        %74 = arith.cmpi sge, %67, %73 : vector<8x32xi32>
        %c6_i32 = arith.constant 6 : i32
        %75 = vector.broadcast %c6_i32 : i32 to vector<8x32xi32>
        %76 = arith.cmpi slt, %67, %75 : vector<8x32xi32>
        %77 = arith.andi %74, %76 : vector<8x32xi1>
        %78 = vector.extract_strided_slice %65 {offsets = [0, 30], sizes = [8, 2], strides = [1, 1]} : vector<8x32xf32> to vector<8x2xf32>
        %79 = vector.extract_strided_slice %65 {offsets = [0, 0], sizes = [8, 30], strides = [1, 1]} : vector<8x32xf32> to vector<8x30xf32>
        %80 = tpu.concatenate %78, %79 in 1 : vector<8x2xf32>, vector<8x30xf32> -> vector<8x32xf32>
        %81 = vector.extract_strided_slice %65 {offsets = [0, 2], sizes = [8, 30], strides = [1, 1]} : vector<8x32xf32> to vector<8x30xf32>
        %82 = vector.extract_strided_slice %65 {offsets = [0, 0], sizes = [8, 2], strides = [1, 1]} : vector<8x32xf32> to vector<8x2xf32>
        %83 = tpu.concatenate %81, %82 in 1 : vector<8x30xf32>, vector<8x2xf32> -> vector<8x32xf32>
        %84 = arith.select %72, %83, %65 : vector<8x32xi1>, vector<8x32xf32>
        %85 = arith.select %77, %80, %84 : vector<8x32xi1>, vector<8x32xf32>
        %c3_i32_23 = arith.constant 3 : i32
        %86 = vector.broadcast %c3_i32_23 : i32 to vector<8x32xi32>
        %87 = arith.andi %25, %86 : vector<8x32xi32>
        %c1_i32_24 = arith.constant 1 : i32
        %88 = vector.broadcast %c1_i32_24 : i32 to vector<8x32xi32>
        %89 = arith.cmpi sge, %87, %88 : vector<8x32xi32>
        %c2_i32_25 = arith.constant 2 : i32
        %90 = vector.broadcast %c2_i32_25 : i32 to vector<8x32xi32>
        %91 = arith.cmpi slt, %87, %90 : vector<8x32xi32>
        %92 = arith.andi %89, %91 : vector<8x32xi1>
        %c2_i32_26 = arith.constant 2 : i32
        %93 = vector.broadcast %c2_i32_26 : i32 to vector<8x32xi32>
        %94 = arith.cmpi sge, %87, %93 : vector<8x32xi32>
        %c3_i32_27 = arith.constant 3 : i32
        %95 = vector.broadcast %c3_i32_27 : i32 to vector<8x32xi32>
        %96 = arith.cmpi slt, %87, %95 : vector<8x32xi32>
        %97 = arith.andi %94, %96 : vector<8x32xi1>
        %98 = vector.extract_strided_slice %85 {offsets = [0, 31], sizes = [8, 1], strides = [1, 1]} : vector<8x32xf32> to vector<8x1xf32>
        %99 = vector.extract_strided_slice %85 {offsets = [0, 0], sizes = [8, 31], strides = [1, 1]} : vector<8x32xf32> to vector<8x31xf32>
        %100 = tpu.concatenate %98, %99 in 1 : vector<8x1xf32>, vector<8x31xf32> -> vector<8x32xf32>
        %101 = vector.extract_strided_slice %85 {offsets = [0, 1], sizes = [8, 31], strides = [1, 1]} : vector<8x32xf32> to vector<8x31xf32>
        %102 = vector.extract_strided_slice %85 {offsets = [0, 0], sizes = [8, 1], strides = [1, 1]} : vector<8x32xf32> to vector<8x1xf32>
        %103 = tpu.concatenate %101, %102 in 1 : vector<8x31xf32>, vector<8x1xf32> -> vector<8x32xf32>
        %104 = arith.select %92, %103, %85 : vector<8x32xi1>, vector<8x32xf32>
        %105 = arith.select %97, %100, %104 : vector<8x32xi1>, vector<8x32xf32>
        %106 = tpu.concatenate %18, %23 in 1 : vector<8x16xf32>, vector<8x16xf32> -> vector<8x32xf32>
        %107 = tpu.iota {dimensions = array<i32: 1>} : vector<8x32xi32>
        %c31_i32_28 = arith.constant 31 : i32
        %108 = vector.broadcast %c31_i32_28 : i32 to vector<8x32xi32>
        %109 = arith.andi %107, %108 : vector<8x32xi32>
        %c8_i32_29 = arith.constant 8 : i32
        %110 = vector.broadcast %c8_i32_29 : i32 to vector<8x32xi32>
        %111 = arith.cmpi sge, %109, %110 : vector<8x32xi32>
        %c16_i32_30 = arith.constant 16 : i32
        %112 = vector.broadcast %c16_i32_30 : i32 to vector<8x32xi32>
        %113 = arith.cmpi slt, %109, %112 : vector<8x32xi32>
        %114 = arith.andi %111, %113 : vector<8x32xi1>
        %c16_i32_31 = arith.constant 16 : i32
        %115 = vector.broadcast %c16_i32_31 : i32 to vector<8x32xi32>
        %116 = arith.cmpi sge, %109, %115 : vector<8x32xi32>
        %c24_i32_32 = arith.constant 24 : i32
        %117 = vector.broadcast %c24_i32_32 : i32 to vector<8x32xi32>
        %118 = arith.cmpi slt, %109, %117 : vector<8x32xi32>
        %119 = arith.andi %116, %118 : vector<8x32xi1>
        %120 = vector.extract_strided_slice %106 {offsets = [0, 24], sizes = [8, 8], strides = [1, 1]} : vector<8x32xf32> to vector<8x8xf32>
        %121 = vector.extract_strided_slice %106 {offsets = [0, 0], sizes = [8, 24], strides = [1, 1]} : vector<8x32xf32> to vector<8x24xf32>
        %122 = tpu.concatenate %120, %121 in 1 : vector<8x8xf32>, vector<8x24xf32> -> vector<8x32xf32>
        %123 = vector.extract_strided_slice %106 {offsets = [0, 8], sizes = [8, 24], strides = [1, 1]} : vector<8x32xf32> to vector<8x24xf32>
        %124 = vector.extract_strided_slice %106 {offsets = [0, 0], sizes = [8, 8], strides = [1, 1]} : vector<8x32xf32> to vector<8x8xf32>
        %125 = tpu.concatenate %123, %124 in 1 : vector<8x24xf32>, vector<8x8xf32> -> vector<8x32xf32>
        %126 = arith.select %114, %125, %106 : vector<8x32xi1>, vector<8x32xf32>
        %127 = arith.select %119, %122, %126 : vector<8x32xi1>, vector<8x32xf32>
        %c15_i32_33 = arith.constant 15 : i32
        %128 = vector.broadcast %c15_i32_33 : i32 to vector<8x32xi32>
        %129 = arith.andi %107, %128 : vector<8x32xi32>
        %c4_i32_34 = arith.constant 4 : i32
        %130 = vector.broadcast %c4_i32_34 : i32 to vector<8x32xi32>
        %131 = arith.cmpi sge, %129, %130 : vector<8x32xi32>
        %c8_i32_35 = arith.constant 8 : i32
        %132 = vector.broadcast %c8_i32_35 : i32 to vector<8x32xi32>
        %133 = arith.cmpi slt, %129, %132 : vector<8x32xi32>
        %134 = arith.andi %131, %133 : vector<8x32xi1>
        %c8_i32_36 = arith.constant 8 : i32
        %135 = vector.broadcast %c8_i32_36 : i32 to vector<8x32xi32>
        %136 = arith.cmpi sge, %129, %135 : vector<8x32xi32>
        %c12_i32_37 = arith.constant 12 : i32
        %137 = vector.broadcast %c12_i32_37 : i32 to vector<8x32xi32>
        %138 = arith.cmpi slt, %129, %137 : vector<8x32xi32>
        %139 = arith.andi %136, %138 : vector<8x32xi1>
        %140 = vector.extract_strided_slice %127 {offsets = [0, 28], sizes = [8, 4], strides = [1, 1]} : vector<8x32xf32> to vector<8x4xf32>
        %141 = vector.extract_strided_slice %127 {offsets = [0, 0], sizes = [8, 28], strides = [1, 1]} : vector<8x32xf32> to vector<8x28xf32>
        %142 = tpu.concatenate %140, %141 in 1 : vector<8x4xf32>, vector<8x28xf32> -> vector<8x32xf32>
        %143 = vector.extract_strided_slice %127 {offsets = [0, 4], sizes = [8, 28], strides = [1, 1]} : vector<8x32xf32> to vector<8x28xf32>
        %144 = vector.extract_strided_slice %127 {offsets = [0, 0], sizes = [8, 4], strides = [1, 1]} : vector<8x32xf32> to vector<8x4xf32>
        %145 = tpu.concatenate %143, %144 in 1 : vector<8x28xf32>, vector<8x4xf32> -> vector<8x32xf32>
        %146 = arith.select %134, %145, %127 : vector<8x32xi1>, vector<8x32xf32>
        %147 = arith.select %139, %142, %146 : vector<8x32xi1>, vector<8x32xf32>
        %c7_i32_38 = arith.constant 7 : i32
        %148 = vector.broadcast %c7_i32_38 : i32 to vector<8x32xi32>
        %149 = arith.andi %107, %148 : vector<8x32xi32>
        %c2_i32_39 = arith.constant 2 : i32
        %150 = vector.broadcast %c2_i32_39 : i32 to vector<8x32xi32>
        %151 = arith.cmpi sge, %149, %150 : vector<8x32xi32>
        %c4_i32_40 = arith.constant 4 : i32
        %152 = vector.broadcast %c4_i32_40 : i32 to vector<8x32xi32>
        %153 = arith.cmpi slt, %149, %152 : vector<8x32xi32>
        %154 = arith.andi %151, %153 : vector<8x32xi1>
        %c4_i32_41 = arith.constant 4 : i32
        %155 = vector.broadcast %c4_i32_41 : i32 to vector<8x32xi32>
        %156 = arith.cmpi sge, %149, %155 : vector<8x32xi32>
        %c6_i32_42 = arith.constant 6 : i32
        %157 = vector.broadcast %c6_i32_42 : i32 to vector<8x32xi32>
        %158 = arith.cmpi slt, %149, %157 : vector<8x32xi32>
        %159 = arith.andi %156, %158 : vector<8x32xi1>
        %160 = vector.extract_strided_slice %147 {offsets = [0, 30], sizes = [8, 2], strides = [1, 1]} : vector<8x32xf32> to vector<8x2xf32>
        %161 = vector.extract_strided_slice %147 {offsets = [0, 0], sizes = [8, 30], strides = [1, 1]} : vector<8x32xf32> to vector<8x30xf32>
        %162 = tpu.concatenate %160, %161 in 1 : vector<8x2xf32>, vector<8x30xf32> -> vector<8x32xf32>
        %163 = vector.extract_strided_slice %147 {offsets = [0, 2], sizes = [8, 30], strides = [1, 1]} : vector<8x32xf32> to vector<8x30xf32>
        %164 = vector.extract_strided_slice %147 {offsets = [0, 0], sizes = [8, 2], strides = [1, 1]} : vector<8x32xf32> to vector<8x2xf32>
        %165 = tpu.concatenate %163, %164 in 1 : vector<8x30xf32>, vector<8x2xf32> -> vector<8x32xf32>
        %166 = arith.select %154, %165, %147 : vector<8x32xi1>, vector<8x32xf32>
        %167 = arith.select %159, %162, %166 : vector<8x32xi1>, vector<8x32xf32>
        %c3_i32_43 = arith.constant 3 : i32
        %168 = vector.broadcast %c3_i32_43 : i32 to vector<8x32xi32>
        %169 = arith.andi %107, %168 : vector<8x32xi32>
        %c1_i32_44 = arith.constant 1 : i32
        %170 = vector.broadcast %c1_i32_44 : i32 to vector<8x32xi32>
        %171 = arith.cmpi sge, %169, %170 : vector<8x32xi32>
        %c2_i32_45 = arith.constant 2 : i32
        %172 = vector.broadcast %c2_i32_45 : i32 to vector<8x32xi32>
        %173 = arith.cmpi slt, %169, %172 : vector<8x32xi32>
        %174 = arith.andi %171, %173 : vector<8x32xi1>
        %c2_i32_46 = arith.constant 2 : i32
        %175 = vector.broadcast %c2_i32_46 : i32 to vector<8x32xi32>
        %176 = arith.cmpi sge, %169, %175 : vector<8x32xi32>
        %c3_i32_47 = arith.constant 3 : i32
        %177 = vector.broadcast %c3_i32_47 : i32 to vector<8x32xi32>
        %178 = arith.cmpi slt, %169, %177 : vector<8x32xi32>
        %179 = arith.andi %176, %178 : vector<8x32xi1>
        %180 = vector.extract_strided_slice %167 {offsets = [0, 31], sizes = [8, 1], strides = [1, 1]} : vector<8x32xf32> to vector<8x1xf32>
        %181 = vector.extract_strided_slice %167 {offsets = [0, 0], sizes = [8, 31], strides = [1, 1]} : vector<8x32xf32> to vector<8x31xf32>
        %182 = tpu.concatenate %180, %181 in 1 : vector<8x1xf32>, vector<8x31xf32> -> vector<8x32xf32>
        %183 = vector.extract_strided_slice %167 {offsets = [0, 1], sizes = [8, 31], strides = [1, 1]} : vector<8x32xf32> to vector<8x31xf32>
        %184 = vector.extract_strided_slice %167 {offsets = [0, 0], sizes = [8, 1], strides = [1, 1]} : vector<8x32xf32> to vector<8x1xf32>
        %185 = tpu.concatenate %183, %184 in 1 : vector<8x31xf32>, vector<8x1xf32> -> vector<8x32xf32>
        %186 = arith.select %174, %185, %167 : vector<8x32xi1>, vector<8x32xf32>
        %187 = arith.select %179, %182, %186 : vector<8x32xi1>, vector<8x32xf32>
        %188 = tpu.concatenate %105, %187 in 0 : vector<8x32xf32>, vector<8x32xf32> -> vector<16x32xf32>
        %189 = tpu.iota {dimensions = array<i32: 0>} : vector<16x32xi32>
        %c15_i32_48 = arith.constant 15 : i32
        %190 = vector.broadcast %c15_i32_48 : i32 to vector<16x32xi32>
        %191 = arith.andi %189, %190 : vector<16x32xi32>
        %c4_i32_49 = arith.constant 4 : i32
        %192 = vector.broadcast %c4_i32_49 : i32 to vector<16x32xi32>
        %193 = arith.cmpi sge, %191, %192 : vector<16x32xi32>
        %c8_i32_50 = arith.constant 8 : i32
        %194 = vector.broadcast %c8_i32_50 : i32 to vector<16x32xi32>
        %195 = arith.cmpi slt, %191, %194 : vector<16x32xi32>
        %196 = arith.andi %193, %195 : vector<16x32xi1>
        %c8_i32_51 = arith.constant 8 : i32
        %197 = vector.broadcast %c8_i32_51 : i32 to vector<16x32xi32>
        %198 = arith.cmpi sge, %191, %197 : vector<16x32xi32>
        %c12_i32_52 = arith.constant 12 : i32
        %199 = vector.broadcast %c12_i32_52 : i32 to vector<16x32xi32>
        %200 = arith.cmpi slt, %191, %199 : vector<16x32xi32>
        %201 = arith.andi %198, %200 : vector<16x32xi1>
        %202 = vector.extract_strided_slice %188 {offsets = [12, 0], sizes = [4, 32], strides = [1, 1]} : vector<16x32xf32> to vector<4x32xf32>
        %203 = vector.extract_strided_slice %188 {offsets = [0, 0], sizes = [12, 32], strides = [1, 1]} : vector<16x32xf32> to vector<12x32xf32>
        %204 = tpu.concatenate %202, %203 in 0 : vector<4x32xf32>, vector<12x32xf32> -> vector<16x32xf32>
        %205 = vector.extract_strided_slice %188 {offsets = [4, 0], sizes = [12, 32], strides = [1, 1]} : vector<16x32xf32> to vector<12x32xf32>
        %206 = vector.extract_strided_slice %188 {offsets = [0, 0], sizes = [4, 32], strides = [1, 1]} : vector<16x32xf32> to vector<4x32xf32>
        %207 = tpu.concatenate %205, %206 in 0 : vector<12x32xf32>, vector<4x32xf32> -> vector<16x32xf32>
        %208 = arith.select %196, %207, %188 : vector<16x32xi1>, vector<16x32xf32>
        %209 = arith.select %201, %204, %208 : vector<16x32xi1>, vector<16x32xf32>
        %c7_i32_53 = arith.constant 7 : i32
        %210 = vector.broadcast %c7_i32_53 : i32 to vector<16x32xi32>
        %211 = arith.andi %189, %210 : vector<16x32xi32>
        %c2_i32_54 = arith.constant 2 : i32
        %212 = vector.broadcast %c2_i32_54 : i32 to vector<16x32xi32>
        %213 = arith.cmpi sge, %211, %212 : vector<16x32xi32>
        %c4_i32_55 = arith.constant 4 : i32
        %214 = vector.broadcast %c4_i32_55 : i32 to vector<16x32xi32>
        %215 = arith.cmpi slt, %211, %214 : vector<16x32xi32>
        %216 = arith.andi %213, %215 : vector<16x32xi1>
        %c4_i32_56 = arith.constant 4 : i32
        %217 = vector.broadcast %c4_i32_56 : i32 to vector<16x32xi32>
        %218 = arith.cmpi sge, %211, %217 : vector<16x32xi32>
        %c6_i32_57 = arith.constant 6 : i32
        %219 = vector.broadcast %c6_i32_57 : i32 to vector<16x32xi32>
        %220 = arith.cmpi slt, %211, %219 : vector<16x32xi32>
        %221 = arith.andi %218, %220 : vector<16x32xi1>
        %222 = vector.extract_strided_slice %209 {offsets = [14, 0], sizes = [2, 32], strides = [1, 1]} : vector<16x32xf32> to vector<2x32xf32>
        %223 = vector.extract_strided_slice %209 {offsets = [0, 0], sizes = [14, 32], strides = [1, 1]} : vector<16x32xf32> to vector<14x32xf32>
        %224 = tpu.concatenate %222, %223 in 0 : vector<2x32xf32>, vector<14x32xf32> -> vector<16x32xf32>
        %225 = vector.extract_strided_slice %209 {offsets = [2, 0], sizes = [14, 32], strides = [1, 1]} : vector<16x32xf32> to vector<14x32xf32>
        %226 = vector.extract_strided_slice %209 {offsets = [0, 0], sizes = [2, 32], strides = [1, 1]} : vector<16x32xf32> to vector<2x32xf32>
        %227 = tpu.concatenate %225, %226 in 0 : vector<14x32xf32>, vector<2x32xf32> -> vector<16x32xf32>
        %228 = arith.select %216, %227, %209 : vector<16x32xi1>, vector<16x32xf32>
        %229 = arith.select %221, %224, %228 : vector<16x32xi1>, vector<16x32xf32>
        %c3_i32_58 = arith.constant 3 : i32
        %230 = vector.broadcast %c3_i32_58 : i32 to vector<16x32xi32>
        %231 = arith.andi %189, %230 : vector<16x32xi32>
        %c1_i32_59 = arith.constant 1 : i32
        %232 = vector.broadcast %c1_i32_59 : i32 to vector<16x32xi32>
        %233 = arith.cmpi sge, %231, %232 : vector<16x32xi32>
        %c2_i32_60 = arith.constant 2 : i32
        %234 = vector.broadcast %c2_i32_60 : i32 to vector<16x32xi32>
        %235 = arith.cmpi slt, %231, %234 : vector<16x32xi32>
        %236 = arith.andi %233, %235 : vector<16x32xi1>
        %c2_i32_61 = arith.constant 2 : i32
        %237 = vector.broadcast %c2_i32_61 : i32 to vector<16x32xi32>
        %238 = arith.cmpi sge, %231, %237 : vector<16x32xi32>
        %c3_i32_62 = arith.constant 3 : i32
        %239 = vector.broadcast %c3_i32_62 : i32 to vector<16x32xi32>
        %240 = arith.cmpi slt, %231, %239 : vector<16x32xi32>
        %241 = arith.andi %238, %240 : vector<16x32xi1>
        %242 = vector.extract_strided_slice %229 {offsets = [15, 0], sizes = [1, 32], strides = [1, 1]} : vector<16x32xf32> to vector<1x32xf32>
        %243 = vector.extract_strided_slice %229 {offsets = [0, 0], sizes = [15, 32], strides = [1, 1]} : vector<16x32xf32> to vector<15x32xf32>
        %244 = tpu.concatenate %242, %243 in 0 : vector<1x32xf32>, vector<15x32xf32> -> vector<16x32xf32>
        %245 = vector.extract_strided_slice %229 {offsets = [1, 0], sizes = [15, 32], strides = [1, 1]} : vector<16x32xf32> to vector<15x32xf32>
        %246 = vector.extract_strided_slice %229 {offsets = [0, 0], sizes = [1, 32], strides = [1, 1]} : vector<16x32xf32> to vector<1x32xf32>
        %247 = tpu.concatenate %245, %246 in 0 : vector<15x32xf32>, vector<1x32xf32> -> vector<16x32xf32>
        %248 = arith.select %236, %247, %229 : vector<16x32xi1>, vector<16x32xf32>
        %249 = arith.select %241, %244, %248 : vector<16x32xi1>, vector<16x32xf32>
        %c2_i32_63 = arith.constant 2 : i32
        %250 = arith.muli %c2_i32_63, %3 : i32
        %c0_64 = arith.constant 0 : index
        %251 = arith.index_cast %arg5 : i32 to index
        %252 = arith.index_cast %250 : i32 to index
        %c0_65 = arith.constant 0 : index
        %253 = vector.load %arg4[%c0_64, %251, %252, %c0_65] : memref<1x2x32x32xf32, #tpu.memory_space<vmem>>, vector<1x1x16x32xf32>
        %254 = vector.shape_cast %253 : vector<1x1x16x32xf32> to vector<16x32xf32>
        %255 = vector.shape_cast %249 : vector<16x32xf32> to vector<1x1x16x32xf32>
        tpu.vector_store %arg4[%c0_64, %251, %252, %c0_65], %255 {strides = array<i32>} : memref<1x2x32x32xf32, #tpu.memory_space<vmem>>, vector<1x1x16x32xf32>,
      }
      %c2_i32_4 = arith.constant 2 : i32
    }
    %c2_i32_0 = arith.constant 2 : i32
    return
  }
  func.func @transform_0(%arg0: i32, %arg1: i32, %arg2: i32) -> (i32, i32, i32, i32) {
    %c0_i32 = arith.constant 0 : i32
    %c0_i32_0 = arith.constant 0 : i32
    return %arg0, %arg1, %arg2, %c0_i32 : i32, i32, i32, i32
  }
  func.func @transform_1(%arg0: i32, %arg1: i32, %arg2: i32) -> (i32, i32, i32, i32) {
    %c0_i32 = arith.constant 0 : i32
    %c0_i32_0 = arith.constant 0 : i32
    return %arg0, %arg1, %arg2, %c0_i32 : i32, i32, i32, i32
  }
}

</mosaic_0001>

<llo_original>
// kernel: tpu_custom_call.1
$region0: #{tpu_custom_call.1}
  #allocation0 [shape = 'u32[]', space=smem, size = 0x4, offset = 0x4, fixed_abs, tag = 'smem constant byte address 0x4 - core index']
  #allocation1 [shape = 'u32[144,128]{1,0:T(1,128)}', space=vmem, size = 0x12000, scoped, tag = 'internal scratch']
  %s0 = inlined_call_operand.hbm [shape: f32[2,8,16,16], index: 0, kind: input, shape index: {}]
  %s1 = inlined_call_operand.hbm [shape: f32[2,2,32,32], index: 1, kind: output, shape index: {}]
  %s2 = sld [smem:[#allocation0]]
  $region55: #{tpu_custom_call.1} parent=0
    _
  %s4 = ssub.s32 1, %s2
  %s5 = scalar_select 0, %s4, %s2
  $region1: #{tpu_custom_call.1} parent=0
    #allocation2 [shape = 'u8[131072]{0}', space=vmem, size = 0x20000, scoped, tag = 'input window, operand 0']
    #allocation3 [shape = 's32[2]{0}', space=sflag, size = 0x8, scoped, tag = 'scoped memory for tpu_custom_call.1']
    #allocation4 [shape = 's32[2]{0}', space=sflag, size = 0x8, scoped, tag = 'scoped memory for tpu_custom_call.1']
    #allocation5 [shape = 'u8[65536]{0}', space=vmem, size = 0x10000, scoped, tag = 'output window, operand 0']
    %6 = vsyncpa [#allocation3], 0
    %s7 = scalar_lea.sflag [#allocation3], 1
    %8 = vsyncpa %s7, 0
    %9 = vsyncpa [#allocation4], 0
    %s10 = scalar_lea.sflag [#allocation4], 1
    %11 = vsyncpa %s10, 0
    loop: start=0, step=1, limit=4
    $region2: #{tpu_custom_call.1} parent=1 // loop_pre_header
      _
    $region3: #{tpu_custom_call.1} parent=1 // loop_header
      %s13 = sphi 0, %s17
      %p14 = scmp.ge.s32.totalorder %s13, 4
      %s20 = sphi 0, %s39
      %s21 = sphi 0, %s35
      %s22 = sphi 0, %s31
      %s23 = sphi 0, %s20
      %s24 = sphi 0, %s21
      %s25 = sphi 0, %s22
      %s26 = sphi 0, %s23
      %s27 = sphi 0, %s24
      %s28 = sphi 0, %s25
      %s46 = sphi 0, %s48
      %s49 = sphi 0, %s46
      %s50 = sphi 0, %s49
      %s66 = sphi 0, %s50
      %s76 = sphi 0, %s78
      %s79 = sphi 0, %s76
      %s80 = sphi 0, %s79
      %s96 = sphi 0, %s80
    $region4: #{tpu_custom_call.1} parent=1 // loop_header_branch
      %16 = sbr.rel (%p14) target = $region8
    $region5: #{tpu_custom_call.1} parent=1 // loop_body
      %s18 = ssub.s32 %s13, 1
      %s19 = ssub.s32 %s13, 2
      %s29 = sadd.s32 1, %s22
      %p30 = scmp.ge.s32.totalorder %s29, 1
      %s31 = scalar_select %p30, 0, %s29
      %s32 = sadd.s32 1, %s21
      %s33 = scalar_select %p30, %s32, %s21
      %p34 = scmp.ge.s32.totalorder %s33, 1
      %s35 = scalar_select %p34, 0, %s33
      %s36 = sadd.s32 1, %s20
      %s37 = scalar_select %p34, %s36, %s20
      %p38 = scmp.ge.s32.totalorder %s37, 2
      %s39 = scalar_select %p38, 0, %s37
      %s40 = ssub.s32 %s20, %s39
      %s41 = ssub.s32 %s21, %s35
      %s42 = sor.u32 %s40, %s41
      %s43 = ssub.s32 %s22, %s31
      %s44 = sor.u32 %s42, %s43
      %p45 = scmp.eq.s32.totalorder %s44, 0
      %s47 = sadd.s32 %s46, 1
      %s48 = scalar_select %p45, %s46, %s47
      %p51 = pneg %p45
      %p52 = scmp.eq.s32.totalorder %s13, 1
      %p53 = por %p51, %p52
      %p54 = scmp.ne.s32.totalorder %s46, %s49
      %p55 = scmp.eq.s32.totalorder %s13, 0
      %p56 = por %p54, %p55
      %p57 = scmp.ne.s32.totalorder %s46, %s49
      %p58 = scmp.eq.s32.totalorder %s18, 1
      %p59 = por %p57, %p58
      %p60 = scmp.ne.s32.totalorder %s49, %s50
      %p61 = scmp.eq.s32.totalorder %s18, 0
      %p62 = por %p60, %p61
      %p63 = scmp.ne.s32.totalorder %s49, %s50
      %p64 = scmp.eq.s32.totalorder %s19, 1
      %p65 = por %p63, %p64
      %p67 = scmp.ne.s32.totalorder %s50, %s66
      %p68 = scmp.eq.s32.totalorder %s19, 0
      %p69 = por %p67, %p68
      %s70 = ssub.s32 %s20, %s39
      %s71 = ssub.s32 %s21, %s35
      %s72 = sor.u32 %s70, %s71
      %s73 = ssub.s32 %s22, %s31
      %s74 = sor.u32 %s72, %s73
      %p75 = scmp.eq.s32.totalorder %s74, 0
      %s77 = sadd.s32 %s76, 1
      %s78 = scalar_select %p75, %s76, %s77
      %p81 = pneg %p75
      %p82 = scmp.eq.s32.totalorder %s13, 1
      %p83 = por %p81, %p82
      %p84 = scmp.ne.s32.totalorder %s76, %s79
      %p85 = scmp.eq.s32.totalorder %s13, 0
      %p86 = por %p84, %p85
      %p87 = scmp.ne.s32.totalorder %s76, %s79
      %p88 = scmp.eq.s32.totalorder %s18, 1
      %p89 = por %p87, %p88
      %p90 = scmp.ne.s32.totalorder %s79, %s80
      %p91 = scmp.eq.s32.totalorder %s18, 0
      %p92 = por %p90, %p91
      %p93 = scmp.ne.s32.totalorder %s79, %s80
      %p94 = scmp.eq.s32.totalorder %s19, 1
      %p95 = por %p93, %p94
      %p97 = scmp.ne.s32.totalorder %s80, %s96
      %p98 = scmp.eq.s32.totalorder %s19, 0
      %p99 = por %p97, %p98
      %p100 = scmp.le.s32.totalorder 1, %s13
      %p101 = scmp.lt.s32.totalorder %s13, 3
      %p102 = pnand %p100, %p101
      %p103 = pneg %p102
      // Predicated region
      $region9: #{tpu_custom_call.1} parent=5 // pred_check
        _
      $region10: #{tpu_custom_call.1} parent=5 // pred_check_branch
        %105 = sbr.rel (%p102) target = $region12
      $region11: #{tpu_custom_call.1} parent=5 // pred_region
        %s106 = ssub.s32 %s13, 1
      $region12: #{tpu_custom_call.1} parent=5 // pred_fallthru
        _
      %p107 = scmp.lt.s32.totalorder %s13, 2
      // Predicated region
      $region13: #{tpu_custom_call.1} parent=5 // pred_check
        %p108 = pneg %p107
      $region14: #{tpu_custom_call.1} parent=5 // pred_check_branch
        %110 = sbr.rel (%p108) target = $region16
      $region15: #{tpu_custom_call.1} parent=5 // pred_region
        // Predicated region
        $region17: #{tpu_custom_call.1} parent=15 // pred_check
          %p111 = pneg %p56
        $region18: #{tpu_custom_call.1} parent=15 // pred_check_branch
          %113 = sbr.rel (%p111) target = $region20
        $region19: #{tpu_custom_call.1} parent=15 // pred_region
          %s114 = sand.u32 %s46, 1
          %s115 = scalar_lea.sflag [#allocation3], %s114
          %s116 = sand.u32 %s46, 1
          %s117 = smul.addr %s116, 128
          %s118 = scalar_lea.vmem [#allocation2], %s117
          %s119 = smul.u32 8, %s21
          %s120 = smul.u32 2, %s22
          %s122 = ssub.s32 2048, 2048
          %123 = vsyncadd %s115, %s122
          %s124 = smul.addr %s119, 2
          %s125 = sadd.s32 %s120, %s124
          %s126 = smul.addr %s20, 16
          %s127 = sadd.s32 %s125, %s126
          %s128 = smul.addr %s127, 128
          %s129 = scalar_lea.hbm %s0, %s128
          %s130 = sshll.u32 %s118, 4
          %s131 = int_to_ptr.vmem [resolvable:$true] %s130
          %136 = dma.hbm_to_vmem [thread:$0]  %s129, 2048, %s131, %s115, 128, 128, 8
        $region20: #{tpu_custom_call.1} parent=15 // pred_fallthru
          _
      $region16: #{tpu_custom_call.1} parent=5 // pred_fallthru
        _
      %p137 = scmp.le.s32.totalorder 1, %s13
      %p138 = scmp.lt.s32.totalorder %s13, 3
      %p139 = pnand %p137, %p138
      %p140 = pneg %p139
      // Predicated region
      $region21: #{tpu_custom_call.1} parent=5 // pred_check
        _
      $region22: #{tpu_custom_call.1} parent=5 // pred_check_branch
        %142 = sbr.rel (%p139) target = $region24
      $region23: #{tpu_custom_call.1} parent=5 // pred_region
        %s143 = ssub.s32 %s13, 1
        %s144 = sand.u32 %s49, 1
        %s145 = scalar_lea.sflag [#allocation3], %s144
        %s146 = sand.u32 %s49, 1
        %s147 = smul.addr %s146, 128
        %s148 = scalar_lea.vmem [#allocation2], %s147
        // Predicated region
        $region25: #{tpu_custom_call.1} parent=23 // pred_check
          %p149 = pneg %p62
        $region26: #{tpu_custom_call.1} parent=23 // pred_check_branch
          %151 = sbr.rel (%p149) target = $region28
        $region27: #{tpu_custom_call.1} parent=23 // pred_region
          %152 = dma.done %s145, 2048
        $region28: #{tpu_custom_call.1} parent=23 // pred_fallthru
          _
        %s153 = sand.u32 %s49, 1
        %s154 = scalar_lea.sflag [#allocation3], %s153
        %s155 = sand.u32 %s49, 1
        %s156 = smul.addr %s155, 128
        %s157 = scalar_lea.vmem [#allocation2], %s156
        %p158 = pneg %p62
        %p159 = pneg %p59
        %p160 = pneg %p92
        %p161 = pneg %p89
        %s162 = sand.u32 %s79, 1
        %s163 = scalar_lea.sflag [#allocation4], %s162
        %s164 = sand.u32 %s79, 1
        %s165 = smul.addr %s164, 64
        %s166 = scalar_lea.vmem [#allocation5], %s165
        %s167 = smul.u32 8, %s24
        %s168 = smul.u32 2, %s25
        %s169 = smul.u32 2, %s24
        %s170 = smul.u32 4, %s25
        loop: start=0, step=1, limit=2
        $region29: #{tpu_custom_call.1} parent=23 // loop_pre_header
          _
        $region30: #{tpu_custom_call.1} parent=23 // loop_header
          %s172 = sphi 0, %s176
          %p173 = scmp.ge.s32.totalorder %s172, 2
        $region31: #{tpu_custom_call.1} parent=23 // loop_header_branch
          %175 = sbr.rel (%p173) target = $region35
        $region32: #{tpu_custom_call.1} parent=23 // loop_body
          %s177 = smul.u32 %s172, 4
          loop: start=0, step=1, limit=2
          $region36: #{tpu_custom_call.1} parent=32 // loop_pre_header
            _
          $region37: #{tpu_custom_call.1} parent=32 // loop_header
            %s179 = sphi 0, %s183
            %p180 = scmp.ge.s32.totalorder %s179, 2
          $region38: #{tpu_custom_call.1} parent=32 // loop_header_branch
            %182 = sbr.rel (%p180) target = $region42
          $region39: #{tpu_custom_call.1} parent=32 // loop_body
            %s184 = smul.u32 %s179, 8
            %s185 = smul.u32 %s177, 16
            %s186 = sadd.s32 %s184, %s185
            %s187 = scalar_lea.vmem %s148, %s186 [#allocation2]
            %v188 = vld [vmem:[%s187] sm:$0xff]
            %s189 = sadd.s32 %s177, 1
            %s190 = smul.u32 %s189, 16
            %s191 = sadd.s32 %s184, %s190
            %s192 = scalar_lea.vmem %s148, %s191 [#allocation2]
            %v193 = vld [vmem:[%s192] sm:$0xff]
            %s194 = sadd.s32 %s177, 2
            %s195 = smul.u32 %s194, 16
            %s196 = sadd.s32 %s184, %s195
            %s197 = scalar_lea.vmem %s148, %s196 [#allocation2]
            %v198 = vld [vmem:[%s197] sm:$0xff]
            %s199 = sadd.s32 %s177, 3
            %s200 = smul.u32 %s199, 16
            %s201 = sadd.s32 %s184, %s200
            %s202 = scalar_lea.vmem %s148, %s201 [#allocation2]
            %v203 = vld [vmem:[%s202] sm:$0xff]
            %205 = vrot.lane.b32.xlu0 %v193, 16
            %v206 = vpop.permute.xlu0 %205
            %vm208 = vcmask 130048
            %v209 = vsel %vm208, %v188, %v206
            %v210 = vlaneseq
            %v211 = vand.u32 %v210, 127
            %v212 = vand.u32 %v211, 31
            %vm213 = vcmp.ge.s32.totalorder %v212, 8
            %vm214 = vcmp.lt.s32.totalorder %v212, 16
            %vm215 = vmand %vm213, %vm214
            %vm216 = vcmp.ge.s32.totalorder %v212, 16
            %vm217 = vcmp.lt.s32.totalorder %v212, 24
            %vm218 = vmand %vm216, %vm217
            %220 = vrot.lane.b32.xlu0 %v209, 104
            %v221 = vpop.permute.xlu0 %220
            %223 = vrot.lane.b32.xlu0 %v209, 8
            %v224 = vpop.permute.xlu0 %223
            %vm226 = vcmask 64512
            %v227 = vsel %vm226, %v221, %v224
            %228 = vrot.lane.b32.xlu0 %v209, 120
            %v229 = vpop.permute.xlu0 %228
            %231 = vrot.lane.b32.xlu0 %v209, 24
            %v232 = vpop.permute.xlu0 %231
            %vm234 = vcmask 195584
            %v235 = vsel %vm234, %v229, %v232
            %v236 = vsel %vm215, %v235, %v209
            %v237 = vsel %vm218, %v227, %v236
            %v238 = vand.u32 %v211, 15
            %vm239 = vcmp.ge.s32.totalorder %v238, 4
            %vm240 = vcmp.lt.s32.totalorder %v238, 8
            %vm241 = vmand %vm239, %vm240
            %vm242 = vcmp.ge.s32.totalorder %v238, 8
            %vm243 = vcmp.lt.s32.totalorder %v238, 12
            %vm244 = vmand %vm242, %vm243
            %246 = vrot.lane.b32.xlu0 %v237, 100
            %v247 = vpop.permute.xlu0 %246
            %249 = vrot.lane.b32.xlu0 %v237, 4
            %v250 = vpop.permute.xlu0 %249
            %vm252 = vcmask 31744
            %v253 = vsel %vm252, %v247, %v250
            %254 = vrot.lane.b32.xlu0 %v237, 124
            %v255 = vpop.permute.xlu0 %254
            %257 = vrot.lane.b32.xlu0 %v237, 28
            %v258 = vpop.permute.xlu0 %257
            %vm260 = vcmask 228352
            %v261 = vsel %vm260, %v255, %v258
            %v262 = vsel %vm241, %v261, %v237
            %v263 = vsel %vm244, %v253, %v262
            %v264 = vand.u32 %v211, 7
            %vm265 = vcmp.ge.s32.totalorder %v264, 2
            %vm266 = vcmp.lt.s32.totalorder %v264, 4
            %vm267 = vmand %vm265, %vm266
            %vm268 = vcmp.ge.s32.totalorder %v264, 4
            %vm269 = vcmp.lt.s32.totalorder %v264, 6
            %vm270 = vmand %vm268, %vm269
            %272 = vrot.lane.b32.xlu0 %v263, 98
            %v273 = vpop.permute.xlu0 %272
            %275 = vrot.lane.b32.xlu0 %v263, 2
            %v276 = vpop.permute.xlu0 %275
            %vm278 = vcmask 15360
            %v279 = vsel %vm278, %v273, %v276
            %280 = vrot.lane.b32.xlu0 %v263, 126
            %v281 = vpop.permute.xlu0 %280
            %283 = vrot.lane.b32.xlu0 %v263, 30
            %v284 = vpop.permute.xlu0 %283
            %vm286 = vcmask 244736
            %v287 = vsel %vm286, %v281, %v284
            %v288 = vsel %vm267, %v287, %v263
            %v289 = vsel %vm270, %v279, %v288
            %v290 = vand.u32 %v211, 3
            %vm291 = vcmp.ge.s32.totalorder %v290, 1
            %vm292 = vcmp.lt.s32.totalorder %v290, 2
            %vm293 = vmand %vm291, %vm292
            %vm294 = vcmp.ge.s32.totalorder %v290, 2
            %vm295 = vcmp.lt.s32.totalorder %v290, 3
            %vm296 = vmand %vm294, %vm295
            %298 = vrot.lane.b32.xlu0 %v289, 97
            %v299 = vpop.permute.xlu0 %298
            %301 = vrot.lane.b32.xlu0 %v289, 1
            %v302 = vpop.permute.xlu0 %301
            %vm304 = vcmask 7168
            %v305 = vsel %vm304, %v299, %v302
            %306 = vrot.lane.b32.xlu0 %v289, 127
            %v307 = vpop.permute.xlu0 %306
            %309 = vrot.lane.b32.xlu0 %v289, 31
            %v310 = vpop.permute.xlu0 %309
            %vm312 = vcmask 252928
            %v313 = vsel %vm312, %v307, %v310
            %v314 = vsel %vm293, %v313, %v289
            %v315 = vsel %vm296, %v305, %v314
            %317 = vrot.lane.b32.xlu0 %v203, 16
            %v318 = vpop.permute.xlu0 %317
            %v320 = vsel %vm208, %v198, %v318
            %322 = vrot.lane.b32.xlu0 %v320, 104
            %v323 = vpop.permute.xlu0 %322
            %325 = vrot.lane.b32.xlu0 %v320, 8
            %v326 = vpop.permute.xlu0 %325
            %v328 = vsel %vm226, %v323, %v326
            %329 = vrot.lane.b32.xlu0 %v320, 120
            %v330 = vpop.permute.xlu0 %329
            %332 = vrot.lane.b32.xlu0 %v320, 24
            %v333 = vpop.permute.xlu0 %332
            %v335 = vsel %vm234, %v330, %v333
            %v336 = vsel %vm215, %v335, %v320
            %v337 = vsel %vm218, %v328, %v336
            %339 = vrot.lane.b32.xlu0 %v337, 100
            %v340 = vpop.permute.xlu0 %339
            %342 = vrot.lane.b32.xlu0 %v337, 4
            %v343 = vpop.permute.xlu0 %342
            %v345 = vsel %vm252, %v340, %v343
            %346 = vrot.lane.b32.xlu0 %v337, 124
            %v347 = vpop.permute.xlu0 %346
            %349 = vrot.lane.b32.xlu0 %v337, 28
            %v350 = vpop.permute.xlu0 %349
            %v352 = vsel %vm260, %v347, %v350
            %v353 = vsel %vm241, %v352, %v337
            %v354 = vsel %vm244, %v345, %v353
            %356 = vrot.lane.b32.xlu0 %v354, 98
            %v357 = vpop.permute.xlu0 %356
            %359 = vrot.lane.b32.xlu0 %v354, 2
            %v360 = vpop.permute.xlu0 %359
            %v362 = vsel %vm278, %v357, %v360
            %363 = vrot.lane.b32.xlu0 %v354, 126
            %v364 = vpop.permute.xlu0 %363
            %366 = vrot.lane.b32.xlu0 %v354, 30
            %v367 = vpop.permute.xlu0 %366
            %v369 = vsel %vm286, %v364, %v367
            %v370 = vsel %vm267, %v369, %v354
            %v371 = vsel %vm270, %v362, %v370
            %373 = vrot.lane.b32.xlu0 %v371, 97
            %v374 = vpop.permute.xlu0 %373
            %376 = vrot.lane.b32.xlu0 %v371, 1
            %v377 = vpop.permute.xlu0 %376
            %v379 = vsel %vm304, %v374, %v377
            %380 = vrot.lane.b32.xlu0 %v371, 127
            %v381 = vpop.permute.xlu0 %380
            %383 = vrot.lane.b32.xlu0 %v371, 31
            %v384 = vpop.permute.xlu0 %383
            %v386 = vsel %vm312, %v381, %v384
            %v387 = vsel %vm293, %v386, %v371
            %v388 = vsel %vm296, %v379, %v387
            %v389 = vlaneseq
            %v390 = vshrl.u32 %v389, 7
            %v391 = vadd.s32 %v390, 8
            %v392 = vand.u32 %v390, 15
            %v393 = vand.u32 %v391, 15
            %vm394 = vcmp.ge.s32.totalorder %v392, 4
            %vm395 = vcmp.ge.s32.totalorder %v393, 4
            %vm396 = vcmp.lt.s32.totalorder %v392, 8
            %vm397 = vcmp.lt.s32.totalorder %v393, 8
            %vm398 = vmand %vm394, %vm396
            %vm399 = vmand %vm395, %vm397
            %vm400 = vcmp.ge.s32.totalorder %v392, 8
            %vm401 = vcmp.ge.s32.totalorder %v393, 8
            %vm402 = vcmp.lt.s32.totalorder %v392, 12
            %vm403 = vcmp.lt.s32.totalorder %v393, 12
            %vm404 = vmand %vm400, %vm402
            %vm405 = vmand %vm401, %vm403
            %v407 = vrot.slane %v388, 4
            %vm410 = vcmask 1043456
            %v411 = vrot.slane %v315, 4
            %v412 = vsel %vm410, %v411, %v407
            %v415 = vsel %vm410, %v407, %v411
            %v416 = vsel %vm398, %v412, %v315
            %v417 = vsel %vm399, %v415, %v388
            %v418 = vsel %vm404, %v415, %v416
            %v419 = vsel %vm405, %v412, %v417
            %v420 = vand.u32 %v390, 7
            %v421 = vand.u32 %v391, 7
            %vm422 = vcmp.ge.s32.totalorder %v420, 2
            %vm423 = vcmp.ge.s32.totalorder %v421, 2
            %vm424 = vcmp.lt.s32.totalorder %v420, 4
            %vm425 = vcmp.lt.s32.totalorder %v421, 4
            %vm426 = vmand %vm422, %vm424
            %vm427 = vmand %vm423, %vm425
            %vm428 = vcmp.ge.s32.totalorder %v420, 4
            %vm429 = vcmp.ge.s32.totalorder %v421, 4
            %vm430 = vcmp.lt.s32.totalorder %v420, 6
            %vm431 = vcmp.lt.s32.totalorder %v421, 6
            %vm432 = vmand %vm428, %vm430
            %vm433 = vmand %vm429, %vm431
            %v435 = vrot.slane %v419, 6
            %vm438 = vcmask 1041408
            %v439 = vrot.slane %v418, 6
            %v440 = vsel %vm438, %v439, %v435
            %v443 = vsel %vm438, %v435, %v439
            %vm444 = vcmask 1045504
            %v445 = vrot.slane %v418, 2
            %v446 = vrot.slane %v419, 2
            %v447 = vsel %vm444, %v445, %v446
            %v451 = vsel %vm444, %v446, %v445
            %v452 = vsel %vm426, %v447, %v418
            %v453 = vsel %vm427, %v451, %v419
            %v454 = vsel %vm432, %v443, %v452
            %v455 = vsel %vm433, %v440, %v453
            %v456 = vand.u32 %v390, 3
            %v457 = vand.u32 %v391, 3
            %vm458 = vcmp.ge.s32.totalorder %v456, 1
            %vm459 = vcmp.ge.s32.totalorder %v457, 1
            %vm460 = vcmp.lt.s32.totalorder %v456, 2
            %vm461 = vcmp.lt.s32.totalorder %v457, 2
            %vm462 = vmand %vm458, %vm460
            %vm463 = vmand %vm459, %vm461
            %vm464 = vcmp.ge.s32.totalorder %v456, 2
            %vm465 = vcmp.ge.s32.totalorder %v457, 2
            %vm466 = vcmp.lt.s32.totalorder %v456, 3
            %vm467 = vcmp.lt.s32.totalorder %v457, 3
            %vm468 = vmand %vm464, %vm466
            %vm469 = vmand %vm465, %vm467
            %v471 = vrot.slane %v455, 7
            %vm474 = vcmask 1040384
            %v475 = vrot.slane %v454, 7
            %v476 = vsel %vm474, %v475, %v471
            %v479 = vsel %vm474, %v471, %v475
            %vm480 = vcmask 1046528
            %v481 = vrot.slane %v454, 1
            %v482 = vrot.slane %v455, 1
            %v483 = vsel %vm480, %v481, %v482
            %v487 = vsel %vm480, %v482, %v481
            %v488 = vsel %vm462, %v483, %v454
            %v489 = vsel %vm463, %v487, %v455
            %v490 = vsel %vm468, %v479, %v488
            %v491 = vsel %vm469, %v476, %v489
            %s492 = smul.u32 %s179, 16
            %s493 = smul.u32 %s172, 32
            %s494 = sadd.s32 %s492, %s493
            %s495 = scalar_lea.vmem %s166, %s494 [#allocation5]
            %vm496 = vcmask 261120
            %497 = vst.msk [vmem:[%s495] sm:$0xff] %vm496, %v490
            %498 = vst.msk [vmem:[%s495 + $0x8] sm:$0xff] %vm496, %v491
          $region40: #{tpu_custom_call.1} parent=32 // loop_footer
            %s183 = sadd.s32 1, %s179
          $region41: #{tpu_custom_call.1} parent=32 // loop_footer_branch
            %178 = sbr.rel target = $region37
          $region42: #{tpu_custom_call.1} parent=32 // loop_exit
            _
        $region33: #{tpu_custom_call.1} parent=23 // loop_footer
          %s176 = sadd.s32 1, %s172
        $region34: #{tpu_custom_call.1} parent=23 // loop_footer_branch
          %171 = sbr.rel target = $region30
        $region35: #{tpu_custom_call.1} parent=23 // loop_exit
          _
        %s499 = sand.u32 %s79, 1
        %s500 = scalar_lea.sflag [#allocation4], %s499
        %s501 = sand.u32 %s79, 1
        %s502 = smul.addr %s501, 64
        %s503 = scalar_lea.vmem [#allocation5], %s502
        // Predicated region
        $region43: #{tpu_custom_call.1} parent=23 // pred_check
          %p504 = pneg %p89
        $region44: #{tpu_custom_call.1} parent=23 // pred_check_branch
          %506 = sbr.rel (%p504) target = $region46
        $region45: #{tpu_custom_call.1} parent=23 // pred_region
          %s507 = smul.u32 2, %s24
          %s508 = smul.u32 4, %s25
          %s510 = ssub.s32 1024, 1024
          %511 = vsyncadd %s500, %s510
          %s512 = smul.addr %s507, 4
          %s513 = sadd.s32 %s508, %s512
          %s514 = smul.addr %s23, 8
          %s515 = sadd.s32 %s513, %s514
          %s516 = smul.addr %s515, 128
          %s517 = scalar_lea.hbm %s1, %s516
          %s518 = sshll.u32 %s503, 4
          %s519 = int_to_ptr.vmem [resolvable:$true] %s518
          %524 = dma.vmem_to_hbm [thread:$0]  %s519, 1024, %s517, %s500, 128, 128, 8
        $region46: #{tpu_custom_call.1} parent=23 // pred_fallthru
          _
      $region24: #{tpu_custom_call.1} parent=5 // pred_fallthru
        _
      %p525 = scmp.le.s32.totalorder 2, %s13
      // Predicated region
      $region47: #{tpu_custom_call.1} parent=5 // pred_check
        %p526 = pneg %p525
      $region48: #{tpu_custom_call.1} parent=5 // pred_check_branch
        %528 = sbr.rel (%p526) target = $region50
      $region49: #{tpu_custom_call.1} parent=5 // pred_region
        %s529 = ssub.s32 %s13, 2
        // Predicated region
        $region51: #{tpu_custom_call.1} parent=49 // pred_check
          %p530 = pneg %p95
        $region52: #{tpu_custom_call.1} parent=49 // pred_check_branch
          %532 = sbr.rel (%p530) target = $region54
        $region53: #{tpu_custom_call.1} parent=49 // pred_region
          %s533 = sand.u32 %s80, 1
          %s534 = scalar_lea.sflag [#allocation4], %s533
          %s535 = sand.u32 %s80, 1
          %s536 = smul.addr %s535, 64
          %s537 = scalar_lea.vmem [#allocation5], %s536
          %538 = dma.done %s534, 1024
        $region54: #{tpu_custom_call.1} parent=49 // pred_fallthru
          _
      $region50: #{tpu_custom_call.1} parent=5 // pred_fallthru
        _
    $region6: #{tpu_custom_call.1} parent=1 // loop_footer
      %s17 = sadd.s32 1, %s13
    $region7: #{tpu_custom_call.1} parent=1 // loop_footer_branch
      %12 = sbr.rel target = $region3
    $region8: #{tpu_custom_call.1} parent=1 // loop_exit
      _
    %539 = vsyncpa [#allocation3], 1
    %s540 = scalar_lea.sflag [#allocation3], 1
    %541 = vsyncpa %s540, 1
    %542 = vsyncpa [#allocation4], 1
    %s543 = scalar_lea.sflag [#allocation4], 1
    %544 = vsyncpa %s543, 1

</llo_original>
